<compile_context>
chip_gen: v7x
topology: tpu7x:2x2x1
jax: 0.10.0
libtpu: 0.0.40
codegen_flags: <defaults>
</compile_context>

<pallas_src>
import functools
import math

import jax
import jax.numpy as jnp
from jax import lax
from jax.experimental import pallas as pl
from jax.experimental.pallas import tpu as pltpu


def _value_network_kernel(x_ref, w1_ref, w2_ref, consts_ref, b3_ref, o_ref, *, ct):
    # x_ref     : [tb, state]      f32       (pipelined block, native layout)
    # w1_ref    : [hidden, state]  mxu dtype (resident, single copy)
    # w2_ref    : [hidden, hidden] mxu dtype (resident, single copy)
    # consts_ref: [hidden, 3]      f32       columns = (b1 | b2 | w3), resident
    # b3_ref    : [1, 1]           f32       SMEM scalar
    # o_ref     : [1, tb]          f32       lane-dense output row block
    tb = x_ref.shape[0]
    n_chunks = tb // ct

    w1 = w1_ref[...]
    w2 = w2_ref[...]
    b1 = consts_ref[:, 0:1]
    b2 = consts_ref[:, 1:2]
    w3 = consts_ref[:, 2:3]
    b3 = b3_ref[0, 0]

    def body(c, carry):
        start = pl.multiple_of(c * ct, ct)
        xc = x_ref[pl.ds(start, ct), :].astype(w1.dtype)          # [ct, state]

        # fc1 + ReLU: contract the state dims on the MXU -> [hidden, ct], f32 acc.
        h1 = lax.dot_general(w1, xc, (((1,), (1,)), ((), ())),
                             preferred_element_type=jnp.float32) + b1
        h1 = jnp.maximum(h1, 0.0)

        # fc2 + ReLU: [hidden, ct]
        h2 = jnp.dot(w2, h1.astype(w2.dtype),
                     preferred_element_type=jnp.float32) + b2
        h2 = jnp.maximum(h2, 0.0)

        # fc3 fused into the fc2 epilogue: VPU multiply + sublane reduction,
        # no second pass over h2 and no nearly-empty K=hidden, N=1 MXU pass.
        out = jnp.sum(h2 * w3, axis=0, keepdims=True) + b3        # [1, ct]
        o_ref[:, pl.ds(start, ct)] = out.astype(o_ref.dtype)
        return carry

    lax.fori_loop(0, n_chunks, body, 0, unroll=True)


def _round_up(x, m):
    return (x + m - 1) // m * m


def _tile_bytes(rows, cols, itemsize):
    # VMEM footprint of one tile after (sublane, 128-lane) padding.
    sublane = (8 * 4) // itemsize
    return _round_up(rows, sublane) * _round_up(cols, 128) * itemsize


def value_network_forward(x, params, *, tb=1024, ct=512, mxu_dtype=jnp.bfloat16):
    """Fused ValueNetwork forward.

    x: [batch, state_size] float32 (streamed natively — no wrapper-side copies).
    params: PyTorch-native weights, w: [out_features, in_features].
    """
    w1, b1 = params["w1"], params["b1"]
    w2, b2 = params["w2"], params["b2"]
    w3, b3 = params["w3"], params["b3"]
    hidden, state_size = w1.shape
    batch = x.shape[0]

    # Batch tile (lane axis of the activations): multiple of 128, no larger than
    # the lane-rounded batch; compute is sub-tiled at <= ct lanes inside the
    # kernel to bound live h1/h2 temps. tb such that num_blocks >= 2 keeps both
    # v7x TensorCores busy under the "parallel" grid axis.
    tb = max(128, _round_up(tb, 128))
    tb = min(tb, _round_up(batch, 128))
    ct = max(128, _round_up(min(ct, tb), 128))
    ct = math.gcd(tb, ct)
    assert tb % ct == 0 and ct % 128 == 0
    num_blocks = pl.cdiv(batch, tb)

    w1m = w1.astype(mxu_dtype)
    w2m = w2.astype(mxu_dtype)
    # Pack the three [hidden]-sized constants into one resident f32 tile.
    consts = jnp.stack(
        [b1.reshape(hidden), b2.reshape(hidden), w3.reshape(hidden)],
        axis=1).astype(jnp.float32)                      # [hidden, 3]
    b3c = b3.reshape(1, 1).astype(jnp.float32)           # SMEM scalar

    itm = jnp.dtype(mxu_dtype).itemsize
    # Explicit VMEM budget: double-buffered x/out blocks + single-copy resident
    # weights + live temp headroom (+ margin). Capped at v7x's 64 MiB physical;
    # shrink tb/ct if a larger config needs more.
    vmem_bytes = (
        2 * _tile_bytes(tb, state_size, 4)        # x blocks (double-buffered)
        + 2 * _tile_bytes(1, tb, 4)               # output blocks
        + _tile_bytes(hidden, state_size, itm)    # w1 (single copy)
        + _tile_bytes(hidden, hidden, itm)        # w2 (single copy)
        + _tile_bytes(hidden, 3, 4)               # packed b1/b2/w3
        + 3 * _tile_bytes(hidden, ct, 4)          # live h1/h2/epilogue temps
        + (4 << 20))                              # scratch / regalloc margin
    vmem_limit = int(min(max(vmem_bytes, 32 << 20), 64 << 20))

    flops = 2 * batch * (state_size * hidden + hidden * hidden + hidden)
    bytes_accessed = (batch * state_size * 4 + batch * 4
                      + (w1m.size + w2m.size) * itm
                      + (consts.size + b3c.size) * 4)

    out = pl.pallas_call(
        functools.partial(_value_network_kernel, ct=ct),
        out_shape=jax.ShapeDtypeStruct((1, batch), jnp.float32),
        grid=(num_blocks,),
        in_specs=[
            # x: pipelined, native-layout f32 blocks (no transpose/cast/pad copy).
            pl.BlockSpec((tb, state_size), lambda i: (i, 0)),
            # Resident single-copy operands (no per-step double buffering).
            pl.BlockSpec(memory_space=pltpu.MemorySpace.VMEM),    # w1
            pl.BlockSpec(memory_space=pltpu.MemorySpace.VMEM),    # w2
            pl.BlockSpec(memory_space=pltpu.MemorySpace.VMEM),    # packed b1/b2/w3
            pl.BlockSpec(memory_space=pltpu.MemorySpace.SMEM),    # b3 scalar
        ],
        out_specs=pl.BlockSpec((1, tb), lambda i: (0, i)),        # lane-dense row
        compiler_params=pltpu.CompilerParams(
            dimension_semantics=("parallel",),
            vmem_limit_bytes=vmem_limit),
        cost_estimate=pl.CostEstimate(flops=flops, transcendentals=0,
                                      bytes_accessed=bytes_accessed),
    )(x, w1m, w2m, consts, b3c)

    return out.reshape(batch, 1)


def init_value_network_params(key, state_size, hidden_size):
    """PyTorch nn.Linear 'default' init: U(-1/sqrt(fan_in), +1/sqrt(fan_in)).
    Weights stored PyTorch-native as [out_features, in_features]."""
    ks = jax.random.split(key, 6)

    def lin(kw, kb, fan_in, fan_out):
        bound = 1.0 / jnp.sqrt(jnp.float32(fan_in))
        w = jax.random.uniform(kw, (fan_out, fan_in), jnp.float32, -bound, bound)
        b = jax.random.uniform(kb, (fan_out,), jnp.float32, -bound, bound)
        return w, b

    w1, b1 = lin(ks[0], ks[1], state_size, hidden_size)
    w2, b2 = lin(ks[2], ks[3], hidden_size, hidden_size)
    w3, b3 = lin(ks[4], ks[5], hidden_size, 1)
    return {"w1": w1, "b1": b1, "w2": w2, "b2": b2, "w3": w3, "b3": b3}


if __name__ == "__main__":
    batch, state_size, hidden_size = 8, 16, 32

    key = jax.random.PRNGKey(0)
    k_params, k_x = jax.random.split(key)
    params = init_value_network_params(k_params, state_size, hidden_size)
    x = jax.random.normal(k_x, (batch, state_size), jnp.float32)

    out = value_network_forward(x, params)   # tb auto-clamps to 128 at this size
    out = jax.block_until_ready(out)

    # Reference in plain JAX with matching bf16 MXU operands / f32 accumulation.
    mxu = jnp.bfloat16
    h1 = jnp.maximum(
        jnp.dot(x.astype(mxu), params["w1"].astype(mxu).T,
                preferred_element_type=jnp.float32) + params["b1"][None, :], 0.0)
    h2 = jnp.maximum(
        jnp.dot(h1.astype(mxu), params["w2"].astype(mxu).T,
                preferred_element_type=jnp.float32) + params["b2"][None, :], 0.0)
    ref = jnp.dot(h2, params["w3"].T) + params["b3"][None, :]

    assert out.shape == (batch, 1)
    assert jnp.allclose(out, ref, atol=1e-2, rtol=1e-2), "mismatch vs reference"

    print("KERNEL_OK")
</pallas_src>

<mosaic_0001>
module attributes {stable_mosaic.version = 11 : i64} {
  func.func @_value_network_kernel(%arg0: i32, %arg1: memref<128x16xf32, #tpu.memory_space<vmem>>, %arg2: memref<32x16xbf16, #tpu.memory_space<vmem>>, %arg3: memref<32x32xbf16, #tpu.memory_space<vmem>>, %arg4: memref<32x3xf32, #tpu.memory_space<vmem>>, %arg5: memref<1x1xf32, #tpu.memory_space<smem>>, %arg6: memref<1x128xf32, #tpu.memory_space<vmem>>) attributes {dimension_semantics = [#tpu.dimension_semantics<parallel>], iteration_bounds = array<i64: 1>, scalar_prefetch = 0 : i64, scratch_operands = 0 : i64, tpu.core_type = #tpu.core_type<tc>, window_params = [{transform_indices = @transform_0, window_bounds = array<i64: 128, 16>}, {pipeline_mode = #tpu.pipeline_mode<synchronous>, transform_indices = @transform_1, window_bounds = array<i64: 32, 16>}, {pipeline_mode = #tpu.pipeline_mode<synchronous>, transform_indices = @transform_2, window_bounds = array<i64: 32, 32>}, {pipeline_mode = #tpu.pipeline_mode<synchronous>, transform_indices = @transform_3, window_bounds = array<i64: 32, 3>}, {transform_indices = @transform_4, window_bounds = array<i64: 1, 1>}, {transform_indices = @transform_5, window_bounds = array<i64: 1, 128>}]} {
    %c0 = arith.constant 0 : index
    %c0_0 = arith.constant 0 : index
    %0 = vector.load %arg2[%c0, %c0_0] : memref<32x16xbf16, #tpu.memory_space<vmem>>, vector<32x16xbf16>
    %c0_1 = arith.constant 0 : index
    %c0_2 = arith.constant 0 : index
    %1 = vector.load %arg3[%c0_1, %c0_2] : memref<32x32xbf16, #tpu.memory_space<vmem>>, vector<32x32xbf16>
    %c0_3 = arith.constant 0 : index
    %c0_4 = arith.constant 0 : index
    %2 = vector.load %arg4[%c0_3, %c0_4] : memref<32x3xf32, #tpu.memory_space<vmem>>, vector<32x1xf32>
    %c0_5 = arith.constant 0 : index
    %c1 = arith.constant 1 : index
    %3 = vector.load %arg4[%c0_5, %c1] : memref<32x3xf32, #tpu.memory_space<vmem>>, vector<32x1xf32>
    %c0_6 = arith.constant 0 : index
    %c2 = arith.constant 2 : index
    %4 = vector.load %arg4[%c0_6, %c2] : memref<32x3xf32, #tpu.memory_space<vmem>>, vector<32x1xf32>
    %c0_7 = arith.constant 0 : index
    %c0_8 = arith.constant 0 : index
    %5 = memref.load %arg5[%c0_7, %c0_8] : memref<1x1xf32, #tpu.memory_space<smem>>
    %c0_i32 = arith.constant 0 : i32
    %c128_i32 = arith.constant 128 : i32
    %6 = arith.muli %c0_i32, %c128_i32 : i32
    %7 = tpu.assume_multiple %6, 128 : i32
    %8 = arith.index_cast %7 : i32 to index
    %c0_9 = arith.constant 0 : index
    %9 = vector.load %arg1[%8, %c0_9] : memref<128x16xf32, #tpu.memory_space<vmem>>, vector<128x16xf32>
    %10 = arith.truncf %9 : vector<128x16xf32> to vector<128x16xbf16>
    %cst = arith.constant dense<0.000000e+00> : vector<32x128xf32>
    %11 = tpu.matmul %0, %10, %cst {dimension_numbers = #tpu.dot_dimension_numbers<[1], [1], [0], [0], [0, 0, 1, 0], [], []>} : vector<32x16xbf16>, vector<128x16xbf16>, vector<32x128xf32> -> vector<32x128xf32>
    %12 = vector.broadcast %2 : vector<32x1xf32> to vector<32x128xf32>
    %13 = arith.addf %11, %12 : vector<32x128xf32>
    %cst_10 = arith.constant 0.000000e+00 : f32
    %14 = vector.broadcast %cst_10 : f32 to vector<32x128xf32>
    %15 = arith.maximumf %13, %14 : vector<32x128xf32>
    %16 = arith.truncf %15 : vector<32x128xf32> to vector<32x128xbf16>
    %cst_11 = arith.constant dense<0.000000e+00> : vector<32x128xf32>
    %17 = tpu.matmul %1, %16, %cst_11 {dimension_numbers = #tpu.dot_dimension_numbers<[1], [0], [0], [1], [0, 0, 1, 1], [], []>} : vector<32x32xbf16>, vector<32x128xbf16>, vector<32x128xf32> -> vector<32x128xf32>
    %18 = vector.broadcast %3 : vector<32x1xf32> to vector<32x128xf32>
    %19 = arith.addf %17, %18 : vector<32x128xf32>
    %cst_12 = arith.constant 0.000000e+00 : f32
    %20 = vector.broadcast %cst_12 : f32 to vector<32x128xf32>
    %21 = arith.maximumf %19, %20 : vector<32x128xf32>
    %22 = vector.broadcast %4 : vector<32x1xf32> to vector<32x128xf32>
    %23 = arith.mulf %21, %22 : vector<32x128xf32>
    %cst_13 = arith.constant dense<0.000000e+00> : vector<128xf32>
    %24 = vector.multi_reduction <add>, %23, %cst_13 [0] : vector<32x128xf32> to vector<128xf32>
    %25 = vector.shape_cast %24 : vector<128xf32> to vector<1x128xf32>
    %26 = vector.broadcast %5 : f32 to vector<1x128xf32>
    %27 = arith.addf %25, %26 : vector<1x128xf32>
    %c0_14 = arith.constant 0 : index
    %28 = arith.index_cast %7 : i32 to index
    %29 = vector.load %arg6[%c0_14, %28] : memref<1x128xf32, #tpu.memory_space<vmem>>, vector<1x128xf32>
    tpu.vector_store %arg6[%c0_14, %28], %27 {strides = array<i32>} : memref<1x128xf32, #tpu.memory_space<vmem>>, vector<1x128xf32>,
    %c1_i32 = arith.constant 1 : i32
    return
  }
  func.func @transform_0(%arg0: i32) -> (i32, i32) {
    %c0_i32 = arith.constant 0 : i32
    %c0_i32_0 = arith.constant 0 : i32
    return %arg0, %c0_i32 : i32, i32
  }
  func.func @transform_1(%arg0: i32) -> (i32, i32) {
    %c0_i32 = arith.constant 0 : i32
    %c0_i32_0 = arith.constant 0 : i32
    %c0_i32_1 = arith.constant 0 : i32
    return %c0_i32, %c0_i32_0 : i32, i32
  }
  func.func @transform_2(%arg0: i32) -> (i32, i32) {
    %c0_i32 = arith.constant 0 : i32
    %c0_i32_0 = arith.constant 0 : i32
    %c0_i32_1 = arith.constant 0 : i32
    return %c0_i32, %c0_i32_0 : i32, i32
  }
  func.func @transform_3(%arg0: i32) -> (i32, i32) {
    %c0_i32 = arith.constant 0 : i32
    %c0_i32_0 = arith.constant 0 : i32
    %c0_i32_1 = arith.constant 0 : i32
    return %c0_i32, %c0_i32_0 : i32, i32
  }
  func.func @transform_4(%arg0: i32) -> (i32, i32) {
    %c0_i32 = arith.constant 0 : i32
    %c0_i32_0 = arith.constant 0 : i32
    %c0_i32_1 = arith.constant 0 : i32
    return %c0_i32, %c0_i32_0 : i32, i32
  }
  func.func @transform_5(%arg0: i32) -> (i32, i32) {
    %c0_i32 = arith.constant 0 : i32
    %c0_i32_0 = arith.constant 0 : i32
    return %c0_i32, %arg0 : i32, i32
  }
}

</mosaic_0001>

<llo_original>
// kernel: tpu_custom_call.1
$region0: #{tpu_custom_call.1}
  #allocation0 [shape = 'u32[]', space=smem, size = 0x4, offset = 0x4, fixed_abs, tag = 'smem constant byte address 0x4 - core index']
  #allocation1 [shape = 'u32[144,128]{1,0:T(1,128)}', space=vmem, size = 0x12000, scoped, tag = 'internal scratch']
  #allocation2 [shape = 'f32[1,1]{1,0:T(1,128)S(6)}', space=smem, size = 0x200, scoped, tag = 'scoped memory for tpu_custom_call.1']
  %s0 = inlined_call_operand.vmem [shape: f32[8,16], index: 0, kind: input, shape index: {}]
  %s1 = inlined_call_operand.vmem [shape: bf16[32,16], index: 1, kind: input, shape index: {}]
  %s2 = inlined_call_operand.vmem [shape: bf16[32,32], index: 2, kind: input, shape index: {}]
  %s3 = inlined_call_operand.vmem [shape: f32[32,3], index: 3, kind: input, shape index: {}]
  %s4 = inlined_call_operand.<no memory space> [shape: f32[1,1], index: 4, kind: input, shape index: {}]
  %s5 = inlined_call_operand.hbm [shape: f32[1,8], index: 5, kind: output, shape index: {}]
  %s6 = sld [smem:[#allocation0]]
  $region30: #{tpu_custom_call.1} parent=0
    _
  %s8 = ssub.s32 1, %s6
  %s9 = scalar_select 0, %s8, %s6
  %10 = sst [smem:[#allocation2]] %s4
  $region1: #{tpu_custom_call.1} parent=0
    #allocation3 [shape = 'u8[512]{0}', space=vmem, size = 0x400, scoped, tag = 'output window, operand 0, single buffered']
    #allocation4 [shape = 's32[1]{0}', space=sflag, size = 0x4, scoped, tag = 'scoped memory for tpu_custom_call.1']
    %11 = vsyncpa [#allocation4], 0
    // Predicated region
    $region2: #{tpu_custom_call.1} parent=1 // pred_check
      _
    $region3: #{tpu_custom_call.1} parent=1 // pred_check_branch
      %13 = sbr.rel (0) target = $region5
    $region4: #{tpu_custom_call.1} parent=1 // pred_region
      _
    $region5: #{tpu_custom_call.1} parent=1 // pred_fallthru
      _
    // Predicated region
    $region6: #{tpu_custom_call.1} parent=1 // pred_check
      _
    $region7: #{tpu_custom_call.1} parent=1 // pred_check_branch
      %15 = sbr.rel (0) target = $region9
    $region8: #{tpu_custom_call.1} parent=1 // pred_region
      _
    $region9: #{tpu_custom_call.1} parent=1 // pred_fallthru
      _
    // Predicated region
    $region10: #{tpu_custom_call.1} parent=1 // pred_check
      _
    $region11: #{tpu_custom_call.1} parent=1 // pred_check_branch
      %17 = sbr.rel (0) target = $region13
    $region12: #{tpu_custom_call.1} parent=1 // pred_region
      _
    $region13: #{tpu_custom_call.1} parent=1 // pred_fallthru
      _
    // Predicated region
    $region14: #{tpu_custom_call.1} parent=1 // pred_check
      _
    $region15: #{tpu_custom_call.1} parent=1 // pred_check_branch
      %19 = sbr.rel (0) target = $region17
    $region16: #{tpu_custom_call.1} parent=1 // pred_region
      _
    $region17: #{tpu_custom_call.1} parent=1 // pred_fallthru
      _
    // Predicated region
    $region18: #{tpu_custom_call.1} parent=1 // pred_check
      _
    $region19: #{tpu_custom_call.1} parent=1 // pred_check_branch
      %21 = sbr.rel (0) target = $region21
    $region20: #{tpu_custom_call.1} parent=1 // pred_region
      _
    $region21: #{tpu_custom_call.1} parent=1 // pred_fallthru
      _
    %v23 = vld [vmem:[%s1] sm:$0xf]
    %v24 = vld [vmem:[%s1 + $0x4] sm:$0xf]
    %v25 = vld [vmem:[%s1 + $0x8] sm:$0xf]
    %v26 = vld [vmem:[%s1 + $0xc] sm:$0xf]
    %v27 = vld [vmem:[%s2] sm:$0xf]
    %v28 = vld [vmem:[%s2 + $0x4] sm:$0xf]
    %v29 = vld [vmem:[%s2 + $0x8] sm:$0xf]
    %v30 = vld [vmem:[%s2 + $0xc] sm:$0xf]
    %v31 = vld [vmem:[%s3] sm:$0xff]
    %v32 = vld [vmem:[%s3 + $0x8] sm:$0xff]
    %v33 = vld [vmem:[%s3 + $0x10] sm:$0xff]
    %v34 = vld [vmem:[%s3 + $0x18] sm:$0xff]
    %s35 = sld [smem:[#allocation2]]
    %v36 = vld [vmem:[%s0] sm:$0xff]
    %v37 = vld [vmem:[%s0 + $0x8] sm:$0xff]
    %v38 = vld [vmem:[%s0 + $0x10] sm:$0xff]
    %v39 = vld [vmem:[%s0 + $0x18] sm:$0xff]
    %v40 = vld [vmem:[%s0 + $0x20] sm:$0xff]
    %v41 = vld [vmem:[%s0 + $0x28] sm:$0xff]
    %v42 = vld [vmem:[%s0 + $0x30] sm:$0xff]
    %v43 = vld [vmem:[%s0 + $0x38] sm:$0xff]
    %v44 = vld [vmem:[%s0 + $0x40] sm:$0xff]
    %v45 = vld [vmem:[%s0 + $0x48] sm:$0xff]
    %v46 = vld [vmem:[%s0 + $0x50] sm:$0xff]
    %v47 = vld [vmem:[%s0 + $0x58] sm:$0xff]
    %v48 = vld [vmem:[%s0 + $0x60] sm:$0xff]
    %v49 = vld [vmem:[%s0 + $0x68] sm:$0xff]
    %v50 = vld [vmem:[%s0 + $0x70] sm:$0xff]
    %v51 = vld [vmem:[%s0 + $0x78] sm:$0xff]
    %v52 = vpack.c.bf16 %v37, %v36
    %v53 = vpack.c.bf16 %v39, %v38
    %v54 = vpack.c.bf16 %v41, %v40
    %v55 = vpack.c.bf16 %v43, %v42
    %v56 = vpack.c.bf16 %v45, %v44
    %v57 = vpack.c.bf16 %v47, %v46
    %v58 = vpack.c.bf16 %v49, %v48
    %v59 = vpack.c.bf16 %v51, %v50
    %61 = vset.pattern.permute.xlu0 0
    %62 = vperm.xlu0 %61, %v31
    %v63 = vpop.permute.xlu0 %62
    %66 = vset.pattern.permute.xlu0 0
    %67 = vperm.xlu0 %66, %v32
    %v68 = vpop.permute.xlu0 %67
    %71 = vset.pattern.permute.xlu0 0
    %72 = vperm.xlu0 %71, %v33
    %v73 = vpop.permute.xlu0 %72
    %76 = vset.pattern.permute.xlu0 0
    %77 = vperm.xlu0 %76, %v34
    %v78 = vpop.permute.xlu0 %77
    %v84 = vunpack.c.l.b16 %v23
    %v85 = vunpack.c.l.b16 %v24
    %v86 = vunpack.c.l.b16 %v25
    %v87 = vunpack.c.l.b16 %v26
    %v88 = vpack.c.b16 %v85, %v84
    %v89 = vpack.c.b16 %v87, %v86
    %vm90 = vcmask 130048
    %v92 = vsel %vm90, %v88, 0
    %v95 = vsel %vm90, %v89, 0
    %v98 = vsel %vm90, %v52, 0
    %v101 = vsel %vm90, %v53, 0
    %v104 = vsel %vm90, %v54, 0
    %v107 = vsel %vm90, %v55, 0
    %v110 = vsel %vm90, %v56, 0
    %v113 = vsel %vm90, %v57, 0
    %v116 = vsel %vm90, %v58, 0
    %v119 = vsel %vm90, %v59, 0
    %121 = vmatprep.subr.bf16.mxu0 0
    %122 = vmatpush1.bf16.xpose.msra.mxu0 %v98
    %123 = vmatprep.subr.bf16.mxu0 0
    %124 = vmatpush1.bf16.xpose.msra.mxu0 %v101
    %125 = vmatprep.subr.bf16.mxu0 0
    %126 = vmatpush1.bf16.xpose.msra.mxu0 %v104
    %127 = vmatprep.subr.bf16.mxu0 0
    %128 = vmatpush1.bf16.xpose.msra.mxu0 %v107
    %129 = vmatprep.subr.bf16.mxu0 0
    %130 = vmatpush1.bf16.xpose.msra.mxu0 %v110
    %131 = vmatprep.subr.bf16.mxu0 0
    %132 = vmatpush1.bf16.xpose.msra.mxu0 %v113
    %133 = vmatprep.subr.bf16.mxu0 0
    %134 = vmatpush1.bf16.xpose.msra.mxu0 %v116
    %135 = vmatprep.subr.bf16.mxu0 0
    %136 = vmatpush1.bf16.xpose.msra.mxu0 %v119
    %137 = vmatprep.subr.bf16.mxu0 0
    %138 = vmatpush1.bf16.xpose.msra.mxu0 0
    %139 = vmatprep.subr.bf16.mxu0 0
    %140 = vmatpush1.bf16.xpose.msra.mxu0 0
    %141 = vmatprep.subr.bf16.mxu0 0
    %142 = vmatpush1.bf16.xpose.msra.mxu0 0
    %143 = vmatprep.subr.bf16.mxu0 0
    %144 = vmatpush1.bf16.xpose.msra.mxu0 0
    %145 = vmatprep.subr.bf16.mxu0 0
    %146 = vmatpush1.bf16.xpose.msra.mxu0 0
    %147 = vmatprep.subr.bf16.mxu0 0
    %148 = vmatpush1.bf16.xpose.msra.mxu0 0
    %149 = vmatprep.subr.bf16.mxu0 0
    %150 = vmatpush1.bf16.xpose.msra.mxu0 0
    %151 = vmatprep.subr.bf16.mxu0 0
    %152 = vmatpush1.bf16.xpose.msra.mxu0 0
    %153 = vmatprep.mubr.bf16.mxu0 0
    %154 = vmatmul.mubr.bf16.gmra.mrb[0].mxu0 %v92
    %v155 = vpop.f32.mrb[0].mxu0
    %v156 = vadd.f32 %v63, %v155
    %v157 = vpop.f32.mrb[0].mxu0
    %v158 = vpop.f32.mrb[0].mxu0
    %v159 = vadd.f32 %v68, %v158
    %v160 = vpop.f32.mrb[0].mxu0
    %161 = vmatprep.mubr.bf16.mxu0 0
    %162 = vmatmul.mubr.bf16.gmra.mrb[0].mxu0 %v95
    %v163 = vpop.f32.mrb[0].mxu0
    %v164 = vadd.f32 %v73, %v163
    %v165 = vpop.f32.mrb[0].mxu0
    %v166 = vpop.f32.mrb[0].mxu0
    %v167 = vadd.f32 %v78, %v166
    %v168 = vpop.f32.mrb[0].mxu0
    %169 = vdwg.mxu0
    %v170 = vmax.f32 %v156, 0.0
    %v171 = vmax.f32 %v159, 0.0
    %v172 = vmax.f32 %v164, 0.0
    %v173 = vmax.f32 %v167, 0.0
    %v174 = vpack.c.bf16 %v171, %v170
    %v175 = vpack.c.bf16 %v173, %v172
    %176 = vset.pattern.permute.xlu0 1
    %177 = vperm.xlu0 %176, %v31
    %v178 = vpop.permute.xlu0 %177
    %180 = vset.pattern.permute.xlu0 1
    %181 = vperm.xlu0 %180, %v32
    %v182 = vpop.permute.xlu0 %181
    %184 = vset.pattern.permute.xlu0 1
    %185 = vperm.xlu0 %184, %v33
    %v186 = vpop.permute.xlu0 %185
    %188 = vset.pattern.permute.xlu0 1
    %189 = vperm.xlu0 %188, %v34
    %v190 = vpop.permute.xlu0 %189
    %v196 = vunpack.c.l.b16 %v27
    %v197 = vunpack.c.l.b16 %v28
    %v198 = vunpack.c.l.b16 %v29
    %v199 = vunpack.c.l.b16 %v30
    %v200 = vpack.c.b16 %v197, %v196
    %v201 = vpack.c.b16 %v199, %v198
    %vm202 = vcmask 261120
    %v204 = vsel %vm202, %v200, 0
    %v207 = vsel %vm202, %v201, 0
    %209 = vmatprep.subr.bf16.mxu0 0
    %210 = vmatpush1.bf16.msra.mxu0 %v174
    %211 = vmatprep.subr.bf16.mxu0 0
    %212 = vmatpush1.bf16.msra.mxu0 %v175
    %213 = vmatprep.subr.bf16.mxu0 0
    %214 = vmatpush1.bf16.msra.mxu0 0
    %215 = vmatprep.subr.bf16.mxu0 0
    %216 = vmatpush1.bf16.msra.mxu0 0
    %217 = vmatprep.subr.bf16.mxu0 0
    %218 = vmatpush1.bf16.msra.mxu0 0
    %219 = vmatprep.subr.bf16.mxu0 0
    %220 = vmatpush1.bf16.msra.mxu0 0
    %221 = vmatprep.subr.bf16.mxu0 0
    %222 = vmatpush1.bf16.msra.mxu0 0
    %223 = vmatprep.subr.bf16.mxu0 0
    %224 = vmatpush1.bf16.msra.mxu0 0
    %225 = vmatprep.subr.bf16.mxu0 0
    %226 = vmatpush1.bf16.msra.mxu0 0
    %227 = vmatprep.subr.bf16.mxu0 0
    %228 = vmatpush1.bf16.msra.mxu0 0
    %229 = vmatprep.subr.bf16.mxu0 0
    %230 = vmatpush1.bf16.msra.mxu0 0
    %231 = vmatprep.subr.bf16.mxu0 0
    %232 = vmatpush1.bf16.msra.mxu0 0
    %233 = vmatprep.subr.bf16.mxu0 0
    %234 = vmatpush1.bf16.msra.mxu0 0
    %235 = vmatprep.subr.bf16.mxu0 0
    %236 = vmatpush1.bf16.msra.mxu0 0
    %237 = vmatprep.subr.bf16.mxu0 0
    %238 = vmatpush1.bf16.msra.mxu0 0
    %239 = vmatprep.subr.bf16.mxu0 0
    %240 = vmatpush1.bf16.msra.mxu0 0
    %241 = vmatprep.mubr.bf16.mxu0 0
    %242 = vmatmul.mubr.bf16.gmra.mrb[0].mxu0 %v204
    %v243 = vpop.f32.mrb[0].mxu0
    %v244 = vadd.f32 %v178, %v243
    %v245 = vpop.f32.mrb[0].mxu0
    %v246 = vpop.f32.mrb[0].mxu0
    %v247 = vadd.f32 %v182, %v246
    %v248 = vpop.f32.mrb[0].mxu0
    %249 = vmatprep.mubr.bf16.mxu0 0
    %250 = vmatmul.mubr.bf16.gmra.mrb[0].mxu0 %v207
    %v251 = vpop.f32.mrb[0].mxu0
    %v252 = vadd.f32 %v186, %v251
    %v253 = vpop.f32.mrb[0].mxu0
    %v254 = vpop.f32.mrb[0].mxu0
    %v255 = vadd.f32 %v190, %v254
    %v256 = vpop.f32.mrb[0].mxu0
    %257 = vdwg.mxu0
    %v258 = vmax.f32 %v244, 0.0
    %v259 = vmax.f32 %v247, 0.0
    %v260 = vmax.f32 %v252, 0.0
    %v261 = vmax.f32 %v255, 0.0
    %262 = vset.pattern.permute.xlu0 2
    %263 = vperm.xlu0 %262, %v31
    %v264 = vpop.permute.xlu0 %263
    %266 = vset.pattern.permute.xlu0 2
    %267 = vperm.xlu0 %266, %v32
    %v268 = vpop.permute.xlu0 %267
    %270 = vset.pattern.permute.xlu0 2
    %271 = vperm.xlu0 %270, %v33
    %v272 = vpop.permute.xlu0 %271
    %274 = vset.pattern.permute.xlu0 2
    %275 = vperm.xlu0 %274, %v34
    %v276 = vpop.permute.xlu0 %275
    %v278 = vmul.f32 %v258, %v264
    %v279 = vmul.f32 %v259, %v268
    %v280 = vmul.f32 %v260, %v272
    %v281 = vmul.f32 %v261, %v276
    %v282 = vadd.f32 %v278, %v279
    %v283 = vadd.f32 %v282, %v280
    %v284 = vadd.f32 %v283, %v281
    %v285 = vrot.slane %v284, 4
    %v286 = vadd.f32 %v284, %v285
    %v287 = vrot.slane %v286, 2
    %v288 = vadd.f32 %v286, %v287
    %v289 = vrot.slane %v288, 1
    %v290 = vadd.f32 %v288, %v289
    %v291 = vstv %s35
    %v292 = vadd.f32 %v290, %v291
    %293 = vst [vmem:[#allocation3] sm:$0x1] %v292
    // Predicated region
    $region22: #{tpu_custom_call.1} parent=1 // pred_check
      _
    $region23: #{tpu_custom_call.1} parent=1 // pred_check_branch
      %295 = sbr.rel (0) target = $region25
    $region24: #{tpu_custom_call.1} parent=1 // pred_region
      %s297 = ssub.s32 16, 16
      %298 = vsyncadd [#allocation4], %s297
      %s300 = sshll.u32 [#allocation3], 4
      %s301 = int_to_ptr.vmem [resolvable:$true] %s300
      %303 = dma.vmem_to_hbm [thread:$0]  %s301, 16, %s5, [#allocation4]
    $region25: #{tpu_custom_call.1} parent=1 // pred_fallthru
      _
    // Predicated region
    $region26: #{tpu_custom_call.1} parent=1 // pred_check
      _
    $region27: #{tpu_custom_call.1} parent=1 // pred_check_branch
      %305 = sbr.rel (0) target = $region29
    $region28: #{tpu_custom_call.1} parent=1 // pred_region
      %306 = dma.done [#allocation4], 16
    $region29: #{tpu_custom_call.1} parent=1 // pred_fallthru
      _
    %307 = vsyncpa [#allocation4], 1

</llo_original>
